<compile_context>
chip_gen: v7x
topology: tpu7x:2x2x1
jax: 0.10.0
libtpu: 0.0.40
codegen_flags: <defaults>
</compile_context>

<pallas_src>
import jax
import jax.numpy as jnp
import numpy as np
from jax.experimental import pallas as pl
from jax.experimental.pallas import tpu as pltpu

# Grayscale weights with the (x+1)/2 normalization folded in:
#   0.299*(x+1)/2 = 0.1495*x + 0.1495, etc.  Bias terms sum to 0.5.
_WR = 0.299 * 0.5
_WG = 0.587 * 0.5
_WB = 0.114 * 0.5
_BIAS = 0.5 * (0.299 + 0.587 + 0.114)   # == 0.5


def _gradmag_kernel(x_ref, halo_ref, o_ref):
    # x_ref:    (3, TH, W)  current RGB tile
    # halo_ref: (3, 2, W)   RGB row just above / just below this tile (-1 at image edges)
    # o_ref:    (TH, W)     gradient magnitude for the tile
    _, TH, W = x_ref.shape

    # Grayscale with normalization folded into the weights (one pass over the tile).
    gray = _WR * x_ref[0] + _WG * x_ref[1] + _WB * x_ref[2] + _BIAS          # (TH, W)

    halo = halo_ref[...]                                                     # (3, 2, W)
    g_above = (_WR * halo[0, 0:1, :] + _WG * halo[1, 0:1, :]
               + _WB * halo[2, 0:1, :] + _BIAS)                              # (1, W)
    g_below = (_WR * halo[0, 1:2, :] + _WG * halo[1, 1:2, :]
               + _WB * halo[2, 1:2, :] + _BIAS)                              # (1, W)

    row = jax.lax.broadcasted_iota(jnp.int32, (TH, W), 0)
    col = jax.lax.broadcasted_iota(jnp.int32, (TH, W), 1)

    # Vertical gradient: gray[i+1] - gray[i-1]; tile-boundary rows patched exactly with
    # the halo rows, so only the (squared-away) interior sign depends on roll direction.
    r_next = pltpu.roll(gray, shift=TH - 1, axis=0)   # row i <- gray[i+1 (mod TH)]
    r_prev = pltpu.roll(gray, shift=1, axis=0)        # row i <- gray[i-1 (mod TH)]
    dv = jnp.where(row == 0, gray[1:2, :] - g_above,
         jnp.where(row == TH - 1, g_below - gray[TH - 2:TH - 1, :],
                   r_next - r_prev))

    # Horizontal gradient: gray[:, j+1] - gray[:, j-1]; zero padding at image edges.
    c_next = pltpu.roll(gray, shift=W - 1, axis=1)
    c_prev = pltpu.roll(gray, shift=1, axis=1)
    dh = jnp.where(col == 0, gray[:, 1:2],
         jnp.where(col == W - 1, -gray[:, W - 2:W - 1],
                   c_next - c_prev))

    o_ref[...] = jnp.sqrt(dv * dv + dh * dh + 1e-6).astype(o_ref.dtype)


def _pick_tile_h(H, W, itemsize):
    """Largest H tile (multiple of 8, divides H) whose 3-channel input block <= ~2 MiB."""
    budget = 2 * 1024 * 1024
    for th in (1024, 512, 256, 128, 64, 32, 16, 8):
        if H % th == 0 and 3 * th * W * itemsize <= budget:
            return th
    return H


def get_gradmag_gray(x, *, tile_h=None):
    """x: (N, 3, H, W) float in [-1, 1] (NCHW) -> (N, 1, H, W) gradient magnitude."""
    N, C, H, W = x.shape
    assert C == 3, "expects RGB input (N, 3, H, W)"
    assert H >= 2 and W >= 2
    if tile_h is None:
        tile_h = _pick_tile_h(H, W, x.dtype.itemsize)
    TH = int(tile_h)
    assert H % TH == 0, (H, TH)
    nH = H // TH

    # Per-tile halo rows (RGB): the row just above / just below every H tile.  Image-edge
    # positions are filled with -1 so the folded grayscale there is exactly 0, matching
    # conv2d's zero padding of x_norm.  Tiny array: 2 rows per tile.
    edge = jnp.full((N, 3, 1, W), -1.0, dtype=x.dtype)
    if nH > 1:
        above = jnp.concatenate([edge, x[:, :, TH - 1:H - 1:TH, :]], axis=2)   # (N,3,nH,W)
        below = jnp.concatenate([x[:, :, TH:H:TH, :], edge], axis=2)           # (N,3,nH,W)
    else:
        above, below = edge, edge
    halo = jnp.stack([above, below], axis=3)                                    # (N,3,nH,2,W)

    return pl.pallas_call(
        _gradmag_kernel,
        out_shape=jax.ShapeDtypeStruct((N, 1, H, W), x.dtype),
        grid=(N, nH),
        in_specs=[
            pl.BlockSpec((None, 3, TH, W), lambda n, h: (n, 0, h, 0)),
            pl.BlockSpec((None, 3, None, 2, W), lambda n, h: (n, 0, h, 0, 0)),
        ],
        out_specs=pl.BlockSpec((None, None, TH, W), lambda n, h: (n, 0, h, 0)),
        compiler_params=pltpu.CompilerParams(
            dimension_semantics=("parallel", "parallel"),
            vmem_limit_bytes=32 * 1024 * 1024,
        ),
    )(x, halo)


def _reference_numpy(x):
    """Pure numpy reference mirroring the PyTorch forward."""
    x_norm = (x + 1.0) / 2.0
    gray = (0.299 * x_norm[:, 0:1] + 0.587 * x_norm[:, 1:2] + 0.114 * x_norm[:, 2:3])
    g = np.pad(gray, ((0, 0), (0, 0), (1, 1), (1, 1)))
    v = g[:, :, 2:, 1:-1] - g[:, :, :-2, 1:-1]      # gray[i+1] - gray[i-1]
    h = g[:, :, 1:-1, 2:] - g[:, :, 1:-1, :-2]      # gray[j+1] - gray[j-1]
    return np.sqrt(v * v + h * h + 1e-6)


if __name__ == "__main__":
    key = jax.random.PRNGKey(0)
    k1, k2 = jax.random.split(key)

    # Small single-tile case (whole H fits one lane-dense tile).
    x1 = jax.random.uniform(k1, (2, 3, 16, 128), jnp.float32, minval=-1.0, maxval=1.0)
    out1 = jax.block_until_ready(get_gradmag_gray(x1))
    np.testing.assert_allclose(np.asarray(out1), _reference_numpy(np.asarray(x1)),
                               rtol=1e-5, atol=1e-5)

    # Multi-tile case: force tile_h=8 so the halo / tile-seam path is exercised.
    x2 = jax.random.uniform(k2, (2, 3, 32, 128), jnp.float32, minval=-1.0, maxval=1.0)
    out2 = jax.block_until_ready(get_gradmag_gray(x2, tile_h=8))
    np.testing.assert_allclose(np.asarray(out2), _reference_numpy(np.asarray(x2)),
                               rtol=1e-5, atol=1e-5)

    print("KERNEL_OK")
</pallas_src>

<mosaic_0001>
module attributes {stable_mosaic.version = 11 : i64} {
  func.func @_gradmag_kernel(%arg0: i32, %arg1: i32, %arg2: memref<1x3x16x128xf32, #tpu.memory_space<vmem>>, %arg3: memref<1x3x1x2x128xf32, #tpu.memory_space<vmem>>, %arg4: memref<1x1x16x128xf32, #tpu.memory_space<vmem>>) attributes {dimension_semantics = [#tpu.dimension_semantics<parallel>, #tpu.dimension_semantics<parallel>], iteration_bounds = array<i64: 2, 1>, scalar_prefetch = 0 : i64, scratch_operands = 0 : i64, tpu.core_type = #tpu.core_type<tc>, window_params = [{transform_indices = @transform_0, window_bounds = array<i64: 1, 3, 16, 128>}, {transform_indices = @transform_1, window_bounds = array<i64: 1, 3, 1, 2, 128>}, {transform_indices = @transform_2, window_bounds = array<i64: 1, 1, 16, 128>}]} {
    %c0 = arith.constant 0 : index
    %c0_0 = arith.constant 0 : index
    %c0_1 = arith.constant 0 : index
    %c0_2 = arith.constant 0 : index
    %0 = vector.load %arg2[%c0, %c0_0, %c0_1, %c0_2] : memref<1x3x16x128xf32, #tpu.memory_space<vmem>>, vector<1x1x16x128xf32>
    %1 = vector.shape_cast %0 : vector<1x1x16x128xf32> to vector<16x128xf32>
    %cst = arith.constant 1.495000e-01 : f32
    %2 = vector.broadcast %cst : f32 to vector<16x128xf32>
    %3 = arith.mulf %2, %1 : vector<16x128xf32>
    %c0_3 = arith.constant 0 : index
    %c1 = arith.constant 1 : index
    %c0_4 = arith.constant 0 : index
    %c0_5 = arith.constant 0 : index
    %4 = vector.load %arg2[%c0_3, %c1, %c0_4, %c0_5] : memref<1x3x16x128xf32, #tpu.memory_space<vmem>>, vector<1x1x16x128xf32>
    %5 = vector.shape_cast %4 : vector<1x1x16x128xf32> to vector<16x128xf32>
    %cst_6 = arith.constant 2.935000e-01 : f32
    %6 = vector.broadcast %cst_6 : f32 to vector<16x128xf32>
    %7 = arith.mulf %6, %5 : vector<16x128xf32>
    %8 = arith.addf %3, %7 : vector<16x128xf32>
    %c0_7 = arith.constant 0 : index
    %c2 = arith.constant 2 : index
    %c0_8 = arith.constant 0 : index
    %c0_9 = arith.constant 0 : index
    %9 = vector.load %arg2[%c0_7, %c2, %c0_8, %c0_9] : memref<1x3x16x128xf32, #tpu.memory_space<vmem>>, vector<1x1x16x128xf32>
    %10 = vector.shape_cast %9 : vector<1x1x16x128xf32> to vector<16x128xf32>
    %cst_10 = arith.constant 5.700000e-02 : f32
    %11 = vector.broadcast %cst_10 : f32 to vector<16x128xf32>
    %12 = arith.mulf %11, %10 : vector<16x128xf32>
    %13 = arith.addf %8, %12 : vector<16x128xf32>
    %cst_11 = arith.constant 5.000000e-01 : f32
    %14 = vector.broadcast %cst_11 : f32 to vector<16x128xf32>
    %15 = arith.addf %13, %14 : vector<16x128xf32>
    %c0_12 = arith.constant 0 : index
    %c0_13 = arith.constant 0 : index
    %c0_14 = arith.constant 0 : index
    %c0_15 = arith.constant 0 : index
    %c0_16 = arith.constant 0 : index
    %16 = vector.load %arg3[%c0_12, %c0_13, %c0_14, %c0_15, %c0_16] : memref<1x3x1x2x128xf32, #tpu.memory_space<vmem>>, vector<1x3x1x2x128xf32>
    %17 = vector.shape_cast %16 : vector<1x3x1x2x128xf32> to vector<3x2x128xf32>
    %18 = vector.extract_strided_slice %17 {offsets = [0, 0, 0], sizes = [1, 1, 128], strides = [1, 1, 1]} : vector<3x2x128xf32> to vector<1x1x128xf32>
    %19 = vector.shape_cast %18 : vector<1x1x128xf32> to vector<1x128xf32>
    %cst_17 = arith.constant 1.495000e-01 : f32
    %20 = vector.broadcast %cst_17 : f32 to vector<1x128xf32>
    %21 = arith.mulf %20, %19 : vector<1x128xf32>
    %22 = vector.extract_strided_slice %17 {offsets = [1, 0, 0], sizes = [1, 1, 128], strides = [1, 1, 1]} : vector<3x2x128xf32> to vector<1x1x128xf32>
    %23 = vector.shape_cast %22 : vector<1x1x128xf32> to vector<1x128xf32>
    %cst_18 = arith.constant 2.935000e-01 : f32
    %24 = vector.broadcast %cst_18 : f32 to vector<1x128xf32>
    %25 = arith.mulf %24, %23 : vector<1x128xf32>
    %26 = arith.addf %21, %25 : vector<1x128xf32>
    %27 = vector.extract_strided_slice %17 {offsets = [2, 0, 0], sizes = [1, 1, 128], strides = [1, 1, 1]} : vector<3x2x128xf32> to vector<1x1x128xf32>
    %28 = vector.shape_cast %27 : vector<1x1x128xf32> to vector<1x128xf32>
    %cst_19 = arith.constant 5.700000e-02 : f32
    %29 = vector.broadcast %cst_19 : f32 to vector<1x128xf32>
    %30 = arith.mulf %29, %28 : vector<1x128xf32>
    %31 = arith.addf %26, %30 : vector<1x128xf32>
    %cst_20 = arith.constant 5.000000e-01 : f32
    %32 = vector.broadcast %cst_20 : f32 to vector<1x128xf32>
    %33 = arith.addf %31, %32 : vector<1x128xf32>
    %34 = vector.extract_strided_slice %17 {offsets = [0, 1, 0], sizes = [1, 1, 128], strides = [1, 1, 1]} : vector<3x2x128xf32> to vector<1x1x128xf32>
    %35 = vector.shape_cast %34 : vector<1x1x128xf32> to vector<1x128xf32>
    %cst_21 = arith.constant 1.495000e-01 : f32
    %36 = vector.broadcast %cst_21 : f32 to vector<1x128xf32>
    %37 = arith.mulf %36, %35 : vector<1x128xf32>
    %38 = vector.extract_strided_slice %17 {offsets = [1, 1, 0], sizes = [1, 1, 128], strides = [1, 1, 1]} : vector<3x2x128xf32> to vector<1x1x128xf32>
    %39 = vector.shape_cast %38 : vector<1x1x128xf32> to vector<1x128xf32>
    %cst_22 = arith.constant 2.935000e-01 : f32
    %40 = vector.broadcast %cst_22 : f32 to vector<1x128xf32>
    %41 = arith.mulf %40, %39 : vector<1x128xf32>
    %42 = arith.addf %37, %41 : vector<1x128xf32>
    %43 = vector.extract_strided_slice %17 {offsets = [2, 1, 0], sizes = [1, 1, 128], strides = [1, 1, 1]} : vector<3x2x128xf32> to vector<1x1x128xf32>
    %44 = vector.shape_cast %43 : vector<1x1x128xf32> to vector<1x128xf32>
    %cst_23 = arith.constant 5.700000e-02 : f32
    %45 = vector.broadcast %cst_23 : f32 to vector<1x128xf32>
    %46 = arith.mulf %45, %44 : vector<1x128xf32>
    %47 = arith.addf %42, %46 : vector<1x128xf32>
    %cst_24 = arith.constant 5.000000e-01 : f32
    %48 = vector.broadcast %cst_24 : f32 to vector<1x128xf32>
    %49 = arith.addf %47, %48 : vector<1x128xf32>
    %50 = tpu.iota {dimensions = array<i32: 0>} : vector<16x128xi32>
    %51 = tpu.iota {dimensions = array<i32: 1>} : vector<16x128xi32>
    %c15_i32 = arith.constant 15 : i32
    %52 = tpu.dynamic_rotate %15 by %c15_i32 dim 0 : vector<16x128xf32>, i32 -> vector<16x128xf32>
    %c1_i32 = arith.constant 1 : i32
    %53 = tpu.dynamic_rotate %15 by %c1_i32 dim 0 : vector<16x128xf32>, i32 -> vector<16x128xf32>
    %c0_i32 = arith.constant 0 : i32
    %54 = vector.broadcast %c0_i32 : i32 to vector<16x128xi32>
    %55 = arith.cmpi eq, %50, %54 : vector<16x128xi32>
    %56 = vector.extract_strided_slice %15 {offsets = [1, 0], sizes = [1, 128], strides = [1, 1]} : vector<16x128xf32> to vector<1x128xf32>
    %57 = arith.subf %56, %33 : vector<1x128xf32>
    %c15_i32_25 = arith.constant 15 : i32
    %58 = vector.broadcast %c15_i32_25 : i32 to vector<16x128xi32>
    %59 = arith.cmpi eq, %50, %58 : vector<16x128xi32>
    %60 = vector.extract_strided_slice %15 {offsets = [14, 0], sizes = [1, 128], strides = [1, 1]} : vector<16x128xf32> to vector<1x128xf32>
    %61 = arith.subf %49, %60 : vector<1x128xf32>
    %62 = arith.subf %52, %53 : vector<16x128xf32>
    %63 = vector.shape_cast %61 : vector<1x128xf32> to vector<1x128xf32>
    %64 = vector.broadcast %63 : vector<1x128xf32> to vector<16x128xf32>
    %65 = arith.select %59, %64, %62 : vector<16x128xi1>, vector<16x128xf32>
    %66 = vector.shape_cast %57 : vector<1x128xf32> to vector<1x128xf32>
    %67 = vector.broadcast %66 : vector<1x128xf32> to vector<16x128xf32>
    %68 = arith.select %55, %67, %65 : vector<16x128xi1>, vector<16x128xf32>
    %c127_i32 = arith.constant 127 : i32
    %69 = tpu.dynamic_rotate %15 by %c127_i32 dim 1 : vector<16x128xf32>, i32 -> vector<16x128xf32>
    %c1_i32_26 = arith.constant 1 : i32
    %70 = tpu.dynamic_rotate %15 by %c1_i32_26 dim 1 : vector<16x128xf32>, i32 -> vector<16x128xf32>
    %c0_i32_27 = arith.constant 0 : i32
    %71 = vector.broadcast %c0_i32_27 : i32 to vector<16x128xi32>
    %72 = arith.cmpi eq, %51, %71 : vector<16x128xi32>
    %73 = vector.extract_strided_slice %15 {offsets = [0, 1], sizes = [16, 1], strides = [1, 1]} : vector<16x128xf32> to vector<16x1xf32>
    %c127_i32_28 = arith.constant 127 : i32
    %74 = vector.broadcast %c127_i32_28 : i32 to vector<16x128xi32>
    %75 = arith.cmpi eq, %51, %74 : vector<16x128xi32>
    %76 = vector.extract_strided_slice %15 {offsets = [0, 126], sizes = [16, 1], strides = [1, 1]} : vector<16x128xf32> to vector<16x1xf32>
    %cst_29 = arith.constant 0.000000e+00 : f32
    %77 = vector.broadcast %cst_29 : f32 to vector<16x1xf32>
    %78 = arith.subf %77, %76 : vector<16x1xf32>
    %79 = arith.subf %69, %70 : vector<16x128xf32>
    %80 = vector.shape_cast %78 : vector<16x1xf32> to vector<16x1xf32>
    %81 = vector.broadcast %80 : vector<16x1xf32> to vector<16x128xf32>
    %82 = arith.select %75, %81, %79 : vector<16x128xi1>, vector<16x128xf32>
    %83 = vector.shape_cast %73 : vector<16x1xf32> to vector<16x1xf32>
    %84 = vector.broadcast %83 : vector<16x1xf32> to vector<16x128xf32>
    %85 = arith.select %72, %84, %82 : vector<16x128xi1>, vector<16x128xf32>
    %86 = arith.mulf %68, %68 : vector<16x128xf32>
    %87 = arith.mulf %85, %85 : vector<16x128xf32>
    %88 = arith.addf %86, %87 : vector<16x128xf32>
    %cst_30 = arith.constant 9.99999997E-7 : f32
    %89 = vector.broadcast %cst_30 : f32 to vector<16x128xf32>
    %90 = arith.addf %88, %89 : vector<16x128xf32>
    %91 = math.sqrt %90 : vector<16x128xf32>
    %c0_31 = arith.constant 0 : index
    %c0_32 = arith.constant 0 : index
    %c0_33 = arith.constant 0 : index
    %c0_34 = arith.constant 0 : index
    %92 = vector.load %arg4[%c0_31, %c0_32, %c0_33, %c0_34] : memref<1x1x16x128xf32, #tpu.memory_space<vmem>>, vector<1x1x16x128xf32>
    %93 = vector.shape_cast %92 : vector<1x1x16x128xf32> to vector<16x128xf32>
    %94 = vector.shape_cast %91 : vector<16x128xf32> to vector<1x1x16x128xf32>
    tpu.vector_store %arg4[%c0_31, %c0_32, %c0_33, %c0_34], %94 {strides = array<i32>} : memref<1x1x16x128xf32, #tpu.memory_space<vmem>>, vector<1x1x16x128xf32>,
    return
  }
  func.func @transform_0(%arg0: i32, %arg1: i32) -> (i32, i32, i32, i32) {
    %c0_i32 = arith.constant 0 : i32
    %c0_i32_0 = arith.constant 0 : i32
    %c0_i32_1 = arith.constant 0 : i32
    return %arg0, %c0_i32, %arg1, %c0_i32_0 : i32, i32, i32, i32
  }
  func.func @transform_1(%arg0: i32, %arg1: i32) -> (i32, i32, i32, i32, i32) {
    %c0_i32 = arith.constant 0 : i32
    %c0_i32_0 = arith.constant 0 : i32
    %c0_i32_1 = arith.constant 0 : i32
    %c0_i32_2 = arith.constant 0 : i32
    return %arg0, %c0_i32, %arg1, %c0_i32_0, %c0_i32_1 : i32, i32, i32, i32, i32
  }
  func.func @transform_2(%arg0: i32, %arg1: i32) -> (i32, i32, i32, i32) {
    %c0_i32 = arith.constant 0 : i32
    %c0_i32_0 = arith.constant 0 : i32
    %c0_i32_1 = arith.constant 0 : i32
    return %arg0, %c0_i32, %arg1, %c0_i32_0 : i32, i32, i32, i32
  }
}

</mosaic_0001>

<llo_original>
// kernel: tpu_custom_call.1
$region0: #{tpu_custom_call.1}
  #allocation0 [shape = 'u32[]', space=smem, size = 0x4, offset = 0x4, fixed_abs, tag = 'smem constant byte address 0x4 - core index']
  #allocation1 [shape = 'u32[144,128]{1,0:T(1,128)}', space=vmem, size = 0x12000, scoped, tag = 'internal scratch']
  %s0 = inlined_call_operand.hbm [shape: f32[2,3,16,128], index: 0, kind: input, shape index: {}]
  %s1 = inlined_call_operand.hbm [shape: f32[2,3,1,2,128], index: 1, kind: input, shape index: {}]
  %s2 = inlined_call_operand.hbm [shape: f32[2,1,16,128], index: 2, kind: output, shape index: {}]
  %s3 = sld [smem:[#allocation0]]
  $region49: #{tpu_custom_call.1} parent=0
    _
  %s5 = ssub.s32 1, %s3
  %s6 = scalar_select 0, %s5, %s3
  $region1: #{tpu_custom_call.1} parent=0
    #allocation2 [shape = 'u8[49152]{0}', space=vmem, size = 0xc000, scoped, tag = 'input window, operand 0']
    #allocation3 [shape = 's32[2]{0}', space=sflag, size = 0x8, scoped, tag = 'scoped memory for tpu_custom_call.1']
    #allocation4 [shape = 's32[2]{0}', space=sflag, size = 0x8, scoped, tag = 'scoped memory for tpu_custom_call.1']
    #allocation5 [shape = 'u8[6144]{0}', space=vmem, size = 0x1800, scoped, tag = 'input window, operand 1']
    #allocation6 [shape = 's32[2]{0}', space=sflag, size = 0x8, scoped, tag = 'scoped memory for tpu_custom_call.1']
    #allocation7 [shape = 'u8[16384]{0}', space=vmem, size = 0x4000, scoped, tag = 'output window, operand 0']
    %7 = vsyncpa [#allocation3], 0
    %s8 = scalar_lea.sflag [#allocation3], 1
    %9 = vsyncpa %s8, 0
    %10 = vsyncpa [#allocation6], 0
    %s11 = scalar_lea.sflag [#allocation6], 1
    %12 = vsyncpa %s11, 0
    %13 = vsyncpa [#allocation4], 0
    %s14 = scalar_lea.sflag [#allocation4], 1
    %15 = vsyncpa %s14, 0
    loop: start=0, step=1, limit=4
    $region2: #{tpu_custom_call.1} parent=1 // loop_pre_header
      _
    $region3: #{tpu_custom_call.1} parent=1 // loop_header
      %s17 = sphi 0, %s21
      %p18 = scmp.ge.s32.totalorder %s17, 4
      %s24 = sphi 0, %s36
      %s25 = sphi 0, %s32
      %s26 = sphi 0, %s24
      %s27 = sphi 0, %s25
      %s28 = sphi 0, %s26
      %s29 = sphi 0, %s27
      %s41 = sphi 0, %s43
      %s44 = sphi 0, %s41
      %s45 = sphi 0, %s44
      %s61 = sphi 0, %s45
      %s69 = sphi 0, %s71
      %s72 = sphi 0, %s69
      %s73 = sphi 0, %s72
      %s89 = sphi 0, %s73
      %s97 = sphi 0, %s99
      %s100 = sphi 0, %s97
      %s101 = sphi 0, %s100
      %s117 = sphi 0, %s101
    $region4: #{tpu_custom_call.1} parent=1 // loop_header_branch
      %20 = sbr.rel (%p18) target = $region8
    $region5: #{tpu_custom_call.1} parent=1 // loop_body
      %s22 = ssub.s32 %s17, 1
      %s23 = ssub.s32 %s17, 2
      %s30 = sadd.s32 1, %s25
      %p31 = scmp.ge.s32.totalorder %s30, 1
      %s32 = scalar_select %p31, 0, %s30
      %s33 = sadd.s32 1, %s24
      %s34 = scalar_select %p31, %s33, %s24
      %p35 = scmp.ge.s32.totalorder %s34, 2
      %s36 = scalar_select %p35, 0, %s34
      %s37 = ssub.s32 %s24, %s36
      %s38 = ssub.s32 %s25, %s32
      %s39 = sor.u32 %s37, %s38
      %p40 = scmp.eq.s32.totalorder %s39, 0
      %s42 = sadd.s32 %s41, 1
      %s43 = scalar_select %p40, %s41, %s42
      %p46 = pneg %p40
      %p47 = scmp.eq.s32.totalorder %s17, 1
      %p48 = por %p46, %p47
      %p49 = scmp.ne.s32.totalorder %s41, %s44
      %p50 = scmp.eq.s32.totalorder %s17, 0
      %p51 = por %p49, %p50
      %p52 = scmp.ne.s32.totalorder %s41, %s44
      %p53 = scmp.eq.s32.totalorder %s22, 1
      %p54 = por %p52, %p53
      %p55 = scmp.ne.s32.totalorder %s44, %s45
      %p56 = scmp.eq.s32.totalorder %s22, 0
      %p57 = por %p55, %p56
      %p58 = scmp.ne.s32.totalorder %s44, %s45
      %p59 = scmp.eq.s32.totalorder %s23, 1
      %p60 = por %p58, %p59
      %p62 = scmp.ne.s32.totalorder %s45, %s61
      %p63 = scmp.eq.s32.totalorder %s23, 0
      %p64 = por %p62, %p63
      %s65 = ssub.s32 %s24, %s36
      %s66 = ssub.s32 %s25, %s32
      %s67 = sor.u32 %s65, %s66
      %p68 = scmp.eq.s32.totalorder %s67, 0
      %s70 = sadd.s32 %s69, 1
      %s71 = scalar_select %p68, %s69, %s70
      %p74 = pneg %p68
      %p75 = scmp.eq.s32.totalorder %s17, 1
      %p76 = por %p74, %p75
      %p77 = scmp.ne.s32.totalorder %s69, %s72
      %p78 = scmp.eq.s32.totalorder %s17, 0
      %p79 = por %p77, %p78
      %p80 = scmp.ne.s32.totalorder %s69, %s72
      %p81 = scmp.eq.s32.totalorder %s22, 1
      %p82 = por %p80, %p81
      %p83 = scmp.ne.s32.totalorder %s72, %s73
      %p84 = scmp.eq.s32.totalorder %s22, 0
      %p85 = por %p83, %p84
      %p86 = scmp.ne.s32.totalorder %s72, %s73
      %p87 = scmp.eq.s32.totalorder %s23, 1
      %p88 = por %p86, %p87
      %p90 = scmp.ne.s32.totalorder %s73, %s89
      %p91 = scmp.eq.s32.totalorder %s23, 0
      %p92 = por %p90, %p91
      %s93 = ssub.s32 %s24, %s36
      %s94 = ssub.s32 %s25, %s32
      %s95 = sor.u32 %s93, %s94
      %p96 = scmp.eq.s32.totalorder %s95, 0
      %s98 = sadd.s32 %s97, 1
      %s99 = scalar_select %p96, %s97, %s98
      %p102 = pneg %p96
      %p103 = scmp.eq.s32.totalorder %s17, 1
      %p104 = por %p102, %p103
      %p105 = scmp.ne.s32.totalorder %s97, %s100
      %p106 = scmp.eq.s32.totalorder %s17, 0
      %p107 = por %p105, %p106
      %p108 = scmp.ne.s32.totalorder %s97, %s100
      %p109 = scmp.eq.s32.totalorder %s22, 1
      %p110 = por %p108, %p109
      %p111 = scmp.ne.s32.totalorder %s100, %s101
      %p112 = scmp.eq.s32.totalorder %s22, 0
      %p113 = por %p111, %p112
      %p114 = scmp.ne.s32.totalorder %s100, %s101
      %p115 = scmp.eq.s32.totalorder %s23, 1
      %p116 = por %p114, %p115
      %p118 = scmp.ne.s32.totalorder %s101, %s117
      %p119 = scmp.eq.s32.totalorder %s23, 0
      %p120 = por %p118, %p119
      %p121 = scmp.le.s32.totalorder 1, %s17
      %p122 = scmp.lt.s32.totalorder %s17, 3
      %p123 = pnand %p121, %p122
      %p124 = pneg %p123
      // Predicated region
      $region9: #{tpu_custom_call.1} parent=5 // pred_check
        _
      $region10: #{tpu_custom_call.1} parent=5 // pred_check_branch
        %126 = sbr.rel (%p123) target = $region12
      $region11: #{tpu_custom_call.1} parent=5 // pred_region
        %s127 = ssub.s32 %s17, 1
      $region12: #{tpu_custom_call.1} parent=5 // pred_fallthru
        _
      %p128 = scmp.lt.s32.totalorder %s17, 2
      // Predicated region
      $region13: #{tpu_custom_call.1} parent=5 // pred_check
        %p129 = pneg %p128
      $region14: #{tpu_custom_call.1} parent=5 // pred_check_branch
        %131 = sbr.rel (%p129) target = $region16
      $region15: #{tpu_custom_call.1} parent=5 // pred_region
        // Predicated region
        $region17: #{tpu_custom_call.1} parent=15 // pred_check
          %p132 = pneg %p51
        $region18: #{tpu_custom_call.1} parent=15 // pred_check_branch
          %134 = sbr.rel (%p132) target = $region20
        $region19: #{tpu_custom_call.1} parent=15 // pred_region
          %s135 = sand.u32 %s41, 1
          %s136 = scalar_lea.sflag [#allocation3], %s135
          %s137 = sand.u32 %s41, 1
          %s138 = smul.addr %s137, 48
          %s139 = scalar_lea.vmem [#allocation2], %s138
          %s140 = smul.u32 2, %s25
          %s142 = ssub.s32 768, 768
          %143 = vsyncadd %s136, %s142
          %s144 = smul.addr %s24, 6
          %s145 = sadd.s32 %s140, %s144
          %s146 = smul.addr %s145, 128
          %s147 = scalar_lea.hbm %s0, %s146
          %s148 = sshll.u32 %s139, 4
          %s149 = int_to_ptr.vmem [resolvable:$true] %s148
          %154 = dma.hbm_to_vmem [thread:$0]  %s147, 768, %s149, %s136, 128, 128, 8
        $region20: #{tpu_custom_call.1} parent=15 // pred_fallthru
          _
        // Predicated region
        $region21: #{tpu_custom_call.1} parent=15 // pred_check
          %p155 = pneg %p79
        $region22: #{tpu_custom_call.1} parent=15 // pred_check_branch
          %157 = sbr.rel (%p155) target = $region24
        $region23: #{tpu_custom_call.1} parent=15 // pred_region
          %s158 = sand.u32 %s69, 1
          %s159 = scalar_lea.sflag [#allocation6], %s158
          %s160 = sand.u32 %s69, 1
          %s161 = smul.addr %s160, 6
          %s162 = scalar_lea.vmem [#allocation5], %s161
          %s164 = ssub.s32 96, 96
          %165 = vsyncadd %s159, %s164
          %s166 = smul.addr %s24, 3
          %s167 = sadd.s32 %s25, %s166
          %s168 = smul.addr %s167, 32
          %s169 = scalar_lea.hbm %s1, %s168
          %s170 = sshll.u32 %s162, 4
          %s171 = int_to_ptr.vmem [resolvable:$true] %s170
          %176 = dma.hbm_to_vmem [thread:$0]  %s169, 96, %s171, %s159, 32, 32, 2
        $region24: #{tpu_custom_call.1} parent=15 // pred_fallthru
          _
      $region16: #{tpu_custom_call.1} parent=5 // pred_fallthru
        _
      %p177 = scmp.le.s32.totalorder 1, %s17
      %p178 = scmp.lt.s32.totalorder %s17, 3
      %p179 = pnand %p177, %p178
      %p180 = pneg %p179
      // Predicated region
      $region25: #{tpu_custom_call.1} parent=5 // pred_check
        _
      $region26: #{tpu_custom_call.1} parent=5 // pred_check_branch
        %182 = sbr.rel (%p179) target = $region28
      $region27: #{tpu_custom_call.1} parent=5 // pred_region
        %s183 = ssub.s32 %s17, 1
        %s184 = sand.u32 %s44, 1
        %s185 = scalar_lea.sflag [#allocation3], %s184
        %s186 = sand.u32 %s44, 1
        %s187 = smul.addr %s186, 48
        %s188 = scalar_lea.vmem [#allocation2], %s187
        // Predicated region
        $region29: #{tpu_custom_call.1} parent=27 // pred_check
          %p189 = pneg %p57
        $region30: #{tpu_custom_call.1} parent=27 // pred_check_branch
          %191 = sbr.rel (%p189) target = $region32
        $region31: #{tpu_custom_call.1} parent=27 // pred_region
          %192 = dma.done %s185, 768
        $region32: #{tpu_custom_call.1} parent=27 // pred_fallthru
          _
        %s193 = sand.u32 %s72, 1
        %s194 = scalar_lea.sflag [#allocation6], %s193
        %s195 = sand.u32 %s72, 1
        %s196 = smul.addr %s195, 6
        %s197 = scalar_lea.vmem [#allocation5], %s196
        // Predicated region
        $region33: #{tpu_custom_call.1} parent=27 // pred_check
          %p198 = pneg %p85
        $region34: #{tpu_custom_call.1} parent=27 // pred_check_branch
          %200 = sbr.rel (%p198) target = $region36
        $region35: #{tpu_custom_call.1} parent=27 // pred_region
          %201 = dma.done %s194, 96
        $region36: #{tpu_custom_call.1} parent=27 // pred_fallthru
          _
        %s202 = sand.u32 %s44, 1
        %s203 = scalar_lea.sflag [#allocation3], %s202
        %s204 = sand.u32 %s44, 1
        %s205 = smul.addr %s204, 48
        %s206 = scalar_lea.vmem [#allocation2], %s205
        %p207 = pneg %p57
        %p208 = pneg %p54
        %s209 = sand.u32 %s72, 1
        %s210 = scalar_lea.sflag [#allocation6], %s209
        %s211 = sand.u32 %s72, 1
        %s212 = smul.addr %s211, 6
        %s213 = scalar_lea.vmem [#allocation5], %s212
        %p214 = pneg %p85
        %p215 = pneg %p82
        %p216 = pneg %p113
        %p217 = pneg %p110
        %s218 = sand.u32 %s100, 1
        %s219 = scalar_lea.sflag [#allocation4], %s218
        %s220 = sand.u32 %s100, 1
        %s221 = smul.addr %s220, 16
        %s222 = scalar_lea.vmem [#allocation7], %s221
        %s223 = smul.u32 2, %s27
        %s224 = smul.u32 2, %s27
        %v225 = vld [vmem:[%s188] sm:$0xff]
        %v226 = vld [vmem:[%s188 + $0x8] sm:$0xff]
        %v227 = vmul.f32 %v225, 0.1495
        %v228 = vmul.f32 %v226, 0.1495
        %s229 = scalar_lea.vmem %s188, 16 [#allocation2]
        %v230 = vld [vmem:[%s229] sm:$0xff]
        %v231 = vld [vmem:[%s229 + $0x8] sm:$0xff]
        %v232 = vmul.f32 %v230, 0.2935
        %v233 = vmul.f32 %v231, 0.2935
        %v234 = vadd.f32 %v227, %v232
        %v235 = vadd.f32 %v228, %v233
        %s236 = scalar_lea.vmem %s188, 32 [#allocation2]
        %v237 = vld [vmem:[%s236] sm:$0xff]
        %v238 = vld [vmem:[%s236 + $0x8] sm:$0xff]
        %v239 = vmul.f32 %v237, 0.057
        %v240 = vmul.f32 %v238, 0.057
        %v241 = vadd.f32 %v234, %v239
        %v242 = vadd.f32 %v235, %v240
        %v243 = vadd.f32 %v241, 0.5
        %v244 = vadd.f32 %v242, 0.5
        %v245 = vld [vmem:[%s197] sm:$0x3]
        %v246 = vld [vmem:[%s197 + $0x2] sm:$0x3]
        %v247 = vld [vmem:[%s197 + $0x4] sm:$0x3]
        %v248 = vmul.f32 %v245, 0.1495
        %v249 = vmul.f32 %v246, 0.2935
        %v250 = vadd.f32 %v248, %v249
        %v251 = vmul.f32 %v247, 0.057
        %v252 = vadd.f32 %v250, %v251
        %v253 = vadd.f32 %v252, 0.5
        %v254 = vlaneseq
        %v255 = vshrl.u32 %v254, 7
        %v256 = vadd.s32 %v255, 8
        %v257 = vlaneseq
        %v258 = vand.u32 %v257, 127
        %v259 = vrot.slane %v243, 1
        %v260 = vrot.slane %v244, 1
        %vm261 = vcmp.lt.s32.totalorder %v255, 7
        %v262 = vsel %vm261, %v259, %v260
        %v263 = vsel %vm261, %v260, %v259
        %v264 = vrot.slane %v243, 7
        %v265 = vrot.slane %v244, 7
        %vm266 = vcmp.lt.s32.totalorder %v255, 1
        %v267 = vsel %vm266, %v264, %v265
        %v268 = vsel %vm266, %v265, %v264
        %vm269 = vcmp.eq.s32.totalorder %v255, 0
        %vm270 = vcmp.eq.s32.totalorder %v256, 0
        %v272 = vrot.slane %v253, 7
        %v274 = vsub.f32 %v243, %v272
        %vm275 = vcmp.eq.s32.totalorder %v255, 15
        %vm276 = vcmp.eq.s32.totalorder %v256, 15
        %v278 = vrot.slane %v244, 5
        %v280 = vsub.f32 %v253, %v278
        %v281 = vsub.f32 %v262, %v268
        %v282 = vsub.f32 %v263, %v267
        %v283 = vlaneseq
        %v284 = vshrl.u32 %v283, 7
        %v285 = vsub.s32 1, %v284
        %v286 = vrot.slane %v280, %v285
        %v287 = vsel %vm275, %v286, %v281
        %v288 = vsel %vm276, %v286, %v282
        %v289 = vlaneseq
        %v290 = vshrl.u32 %v289, 7
        %v291 = vsub.s32 1, %v290
        %v292 = vrot.slane %v274, %v291
        %v293 = vsel %vm269, %v292, %v287
        %v294 = vsel %vm270, %v292, %v288
        %295 = vrot.lane.b32.xlu0 %v243, 127
        %v296 = vpop.permute.xlu0 %295
        %297 = vrot.lane.b32.xlu0 %v244, 127
        %v298 = vpop.permute.xlu0 %297
        %299 = vrot.lane.b32.xlu0 %v243, 1
        %v300 = vpop.permute.xlu0 %299
        %301 = vrot.lane.b32.xlu0 %v244, 1
        %v302 = vpop.permute.xlu0 %301
        %vm303 = vcmp.eq.s32.totalorder %v258, 0
        %vm304 = vcmp.eq.s32.totalorder %v258, 127
        %v305 = vsub.f32 0.0, %v243
        %v306 = vsub.f32 0.0, %v244
        %v307 = vsub.f32 %v296, %v300
        %v308 = vsub.f32 %v298, %v302
        %310 = vset.pattern.permute.xlu0 126
        %311 = vperm.xlu0 %310, %v305
        %v312 = vpop.permute.xlu0 %311
        %315 = vset.pattern.permute.xlu0 126
        %316 = vperm.xlu0 %315, %v306
        %v317 = vpop.permute.xlu0 %316
        %v319 = vsel %vm304, %v312, %v307
        %v320 = vsel %vm304, %v317, %v308
        %322 = vset.pattern.permute.xlu0 1
        %323 = vperm.xlu0 %322, %v243
        %v324 = vpop.permute.xlu0 %323
        %326 = vset.pattern.permute.xlu0 1
        %327 = vperm.xlu0 %326, %v244
        %v328 = vpop.permute.xlu0 %327
        %v330 = vsel %vm303, %v324, %v319
        %v331 = vsel %vm303, %v328, %v320
        %v332 = vmul.f32 %v293, %v293
        %v333 = vmul.f32 %v294, %v294
        %v334 = vmul.f32 %v330, %v330
        %v335 = vmul.f32 %v331, %v331
        %v336 = vadd.f32 %v332, %v334
        %v337 = vadd.f32 %v333, %v335
        %v338 = vadd.f32 %v336, 1e-06
        %v339 = vadd.f32 %v337, 1e-06
        %v340 = vrsqrt.pop %v338
        %v341 = vmul.f32 %v338, %v340
        %vm342 = vcmp.eq.f32.partialorder %v338, inf
        %v343 = vsel %vm342, %v338, %v341
        %vm344 = vcmp.eq.f32.partialorder %v338, 0.0
        %v345 = vand.u32 %v338, 2147483648
        %v346 = vsel %vm344, %v345, %v343
        %v347 = vrsqrt.pop %v339
        %v348 = vmul.f32 %v339, %v347
        %vm349 = vcmp.eq.f32.partialorder %v339, inf
        %v350 = vsel %vm349, %v339, %v348
        %vm351 = vcmp.eq.f32.partialorder %v339, 0.0
        %v352 = vand.u32 %v339, 2147483648
        %v353 = vsel %vm351, %v352, %v350
        %354 = vst [vmem:[%s222] sm:$0xff] %v346
        %355 = vst [vmem:[%s222 + $0x8] sm:$0xff] %v353
        %s356 = sand.u32 %s100, 1
        %s357 = scalar_lea.sflag [#allocation4], %s356
        %s358 = sand.u32 %s100, 1
        %s359 = smul.addr %s358, 16
        %s360 = scalar_lea.vmem [#allocation7], %s359
        // Predicated region
        $region37: #{tpu_custom_call.1} parent=27 // pred_check
          %p361 = pneg %p110
        $region38: #{tpu_custom_call.1} parent=27 // pred_check_branch
          %363 = sbr.rel (%p361) target = $region40
        $region39: #{tpu_custom_call.1} parent=27 // pred_region
          %s364 = smul.u32 2, %s27
          %s366 = ssub.s32 256, 256
          %367 = vsyncadd %s357, %s366
          %s368 = smul.addr %s26, 2
          %s369 = sadd.s32 %s364, %s368
          %s370 = smul.addr %s369, 128
          %s371 = scalar_lea.hbm %s2, %s370
          %s372 = sshll.u32 %s360, 4
          %s373 = int_to_ptr.vmem [resolvable:$true] %s372
          %378 = dma.vmem_to_hbm [thread:$0]  %s373, 256, %s371, %s357, 128, 128, 8
        $region40: #{tpu_custom_call.1} parent=27 // pred_fallthru
          _
      $region28: #{tpu_custom_call.1} parent=5 // pred_fallthru
        _
      %p379 = scmp.le.s32.totalorder 2, %s17
      // Predicated region
      $region41: #{tpu_custom_call.1} parent=5 // pred_check
        %p380 = pneg %p379
      $region42: #{tpu_custom_call.1} parent=5 // pred_check_branch
        %382 = sbr.rel (%p380) target = $region44
      $region43: #{tpu_custom_call.1} parent=5 // pred_region
        %s383 = ssub.s32 %s17, 2
        // Predicated region
        $region45: #{tpu_custom_call.1} parent=43 // pred_check
          %p384 = pneg %p116
        $region46: #{tpu_custom_call.1} parent=43 // pred_check_branch
          %386 = sbr.rel (%p384) target = $region48
        $region47: #{tpu_custom_call.1} parent=43 // pred_region
          %s387 = sand.u32 %s101, 1
          %s388 = scalar_lea.sflag [#allocation4], %s387
          %s389 = sand.u32 %s101, 1
          %s390 = smul.addr %s389, 16
          %s391 = scalar_lea.vmem [#allocation7], %s390
          %392 = dma.done %s388, 256
        $region48: #{tpu_custom_call.1} parent=43 // pred_fallthru
          _
      $region44: #{tpu_custom_call.1} parent=5 // pred_fallthru
        _
    $region6: #{tpu_custom_call.1} parent=1 // loop_footer
      %s21 = sadd.s32 1, %s17
    $region7: #{tpu_custom_call.1} parent=1 // loop_footer_branch
      %16 = sbr.rel target = $region3
    $region8: #{tpu_custom_call.1} parent=1 // loop_exit
      _
    %393 = vsyncpa [#allocation3], 1
    %s394 = scalar_lea.sflag [#allocation3], 1
    %395 = vsyncpa %s394, 1
    %396 = vsyncpa [#allocation6], 1
    %s397 = scalar_lea.sflag [#allocation6], 1
    %398 = vsyncpa %s397, 1
    %399 = vsyncpa [#allocation4], 1
    %s400 = scalar_lea.sflag [#allocation4], 1
    %401 = vsyncpa %s400, 1

</llo_original>
